<compile_context>
chip_gen: v6e
topology: v6e:2x2x1
jax: 0.10.0
libtpu: 0.0.40
codegen_flags: <defaults>
</compile_context>

<pallas_src>
import jax
import jax.numpy as jnp
from jax.experimental import pallas as pl
from jax.experimental.pallas import tpu as pltpu

INPUT_DIM = 2
HIDDEN_DIM = 64      # logical hidden width (matches the PyTorch module)
HIDDEN_PAD = 128     # lane-dense padded hidden width (padding is zeros)
OUTPUT_DIM = 1


def gnn_kernel(adj_ref, x_ref, w1_ref, b1_ref, w2_ref, b2_ref, pool_ref, o_ref):
    adj = adj_ref[0]                                   # (R, R) bf16 block-diagonal
    x = x_ref[0]                                       # (R, INPUT_DIM) f32

    # --- input projection X @ W1 (K = 2): VPU broadcast-FMA, static unroll ---
    xw1 = x[:, 0:1] * w1_ref[0:1, :]
    for f in range(1, INPUT_DIM):                      # static unroll
        xw1 = xw1 + x[:, f:f + 1] * w1_ref[f:f + 1, :]          # (R, Hpad) f32

    # --- GCN layer 1: bf16 MXU operands, f32 accumulate ---------------------
    h1 = jnp.dot(adj, xw1.astype(jnp.bfloat16),
                 preferred_element_type=jnp.float32) + b1_ref[...]
    h1 = jnp.maximum(h1, 0.0)

    # --- GCN layer 2 ---------------------------------------------------------
    hw2 = jnp.dot(h1.astype(jnp.bfloat16), w2_ref[...],
                  preferred_element_type=jnp.float32)
    h2 = jnp.dot(adj, hw2.astype(jnp.bfloat16),
                 preferred_element_type=jnp.float32) + b2_ref[...]
    h2 = jnp.maximum(h2, 0.0)

    # --- per-graph masked mean pool: (GB, R) @ (R, Hpad) -> (GB, Hpad) ------
    # pool[g, :] holds 1/N over graph g's real node rows (0 on padded rows),
    # so padded nodes never skew the mean. Lane-dense 128-wide store.
    o_ref[0] = jnp.dot(pool_ref[...], h2, preferred_element_type=jnp.float32)


def build_norm_adj(edge_index, num_nodes):
    """Dense GCN-normalized adjacency: D^-1/2 (A + I) D^-1/2 (plain-JAX glue).

    Duplicate edges are scatter-added (same behavior as PyG GCNConv on an
    un-coalesced edge_index)."""
    src = edge_index[0]
    dst = edge_index[1]
    loop = jnp.arange(num_nodes, dtype=edge_index.dtype)
    src = jnp.concatenate([src, loop])
    dst = jnp.concatenate([dst, loop])
    # A[i, j] = 1 if there is an edge j -> i (message flows source -> target).
    a = jnp.zeros((num_nodes, num_nodes), jnp.float32).at[dst, src].add(1.0)
    deg = a.sum(axis=1)
    dinv = jnp.where(deg > 0, jax.lax.rsqrt(deg), 0.0)
    return dinv[:, None] * a * dinv[None, :]


def _pad_params(params):
    """Zero-pad hidden dim 64 -> 128 for lane-dense in-kernel layouts."""
    w1, b1, w2, b2, wfc, bfc = params
    hp = HIDDEN_PAD - HIDDEN_DIM
    w1p = jnp.pad(w1, ((0, 0), (0, hp)))                            # f32 (VPU path)
    b1p = jnp.pad(b1, ((0, 0), (0, hp)))
    w2p = jnp.pad(w2, ((0, hp), (0, hp))).astype(jnp.bfloat16)      # bf16 MXU operand
    b2p = jnp.pad(b2, ((0, 0), (0, hp)))
    return w1p, b1p, w2p, b2p, wfc, bfc


def _choose_blocking(num_graphs, n_pad):
    """Graphs per grid step (GB) and number of grid steps."""
    gb = max(1, -(-256 // n_pad))          # target ~256 packed MXU rows per step
    gb = min(gb, num_graphs)
    if -(-num_graphs // gb) < 2 and num_graphs >= 2:
        gb = -(-num_graphs // 2)           # keep >= 2 grid steps (v7x megacore)
    if (gb * n_pad) % 16 != 0:             # bf16 sublane tile is 16 rows
        gb += 1
    num_steps = -(-num_graphs // gb)
    return gb, num_steps


def gnn_forward_batched(x, edge_index, params):
    """x: (G, N, INPUT_DIM), edge_index: (G, 2, E) -> (G, OUTPUT_DIM)."""
    g, n, _ = x.shape
    adj = jax.vmap(build_norm_adj, in_axes=(0, None))(edge_index, n)   # (G, N, N)
    w1p, b1p, w2p, b2p, wfc, bfc = _pad_params(params)

    n_pad = -(-n // 8) * 8
    gb, num_steps = _choose_blocking(g, n_pad)
    g_pad = num_steps * gb
    r = gb * n_pad                                         # packed rows per grid step

    # Pad nodes / graphs with zeros (zero adjacency rows never leak into real
    # rows, and the pooling matrix masks them out of the mean).
    adj_p = jnp.pad(adj, ((0, g_pad - g), (0, n_pad - n), (0, n_pad - n)))
    x_p = jnp.pad(x, ((0, g_pad - g), (0, n_pad - n), (0, 0)))

    # Block-diagonal A_hat per step: (num_steps, R, R), stored bf16.
    blocks = adj_p.reshape(num_steps, gb, n_pad, n_pad)
    eye_gb = jnp.eye(gb, dtype=jnp.float32)
    adj_bd = jnp.einsum('sgij,gh->sgihj', blocks, eye_gb)
    adj_bd = adj_bd.reshape(num_steps, r, r).astype(jnp.bfloat16)

    x_packed = x_p.reshape(num_steps, r, INPUT_DIM)

    # Pooling matrix: pool[g, g*n_pad + i] = 1/n for i < n, else 0.
    pool_row = jnp.concatenate([jnp.full((n,), 1.0 / n, jnp.float32),
                                jnp.zeros((n_pad - n,), jnp.float32)])
    pool = jnp.kron(jnp.eye(gb, dtype=jnp.float32), pool_row[None, :])   # (gb, R)

    const2 = lambda s: (0, 0)   # resident weights: same block every grid step
    pooled = pl.pallas_call(
        gnn_kernel,
        out_shape=jax.ShapeDtypeStruct((num_steps, gb, HIDDEN_PAD), jnp.float32),
        grid=(num_steps,),
        in_specs=[
            pl.BlockSpec((1, r, r), lambda s: (s, 0, 0)),              # adj (bf16)
            pl.BlockSpec((1, r, INPUT_DIM), lambda s: (s, 0, 0)),      # x
            pl.BlockSpec((INPUT_DIM, HIDDEN_PAD), const2),             # w1
            pl.BlockSpec((1, HIDDEN_PAD), const2),                     # b1
            pl.BlockSpec((HIDDEN_PAD, HIDDEN_PAD), const2),            # w2 (bf16)
            pl.BlockSpec((1, HIDDEN_PAD), const2),                     # b2
            pl.BlockSpec((gb, r), const2),                             # pool
        ],
        out_specs=pl.BlockSpec((1, gb, HIDDEN_PAD), lambda s: (s, 0, 0)),
        compiler_params=pltpu.CompilerParams(
            dimension_semantics=("parallel",),
            vmem_limit_bytes=64 * 1024 * 1024),
    )(adj_bd, x_packed, w1p, b1p, w2p, b2p, pool)

    pooled = pooled.reshape(g_pad, HIDDEN_PAD)[:g, :HIDDEN_DIM]        # (G, H)
    # Tiny (H -> 1) head finished in the wrapper (keeps the kernel store
    # lane-dense; this is a handful of FLOPs).
    return pooled @ wfc + bfc


def gnn_forward(x, edge_index, params):
    """Single-graph convenience wrapper; matches torch output shape (OUTPUT_DIM,)."""
    out = gnn_forward_batched(x[None], edge_index[None], params)
    return out.reshape(OUTPUT_DIM)


def init_params(key):
    k1, k2, k3 = jax.random.split(key, 3)
    w1 = jax.random.normal(k1, (INPUT_DIM, HIDDEN_DIM), jnp.float32) * 0.1
    b1 = jnp.zeros((1, HIDDEN_DIM), jnp.float32)
    w2 = jax.random.normal(k2, (HIDDEN_DIM, HIDDEN_DIM), jnp.float32) * 0.1
    b2 = jnp.zeros((1, HIDDEN_DIM), jnp.float32)
    wfc = jax.random.normal(k3, (HIDDEN_DIM, OUTPUT_DIM), jnp.float32) * 0.1
    bfc = jnp.zeros((1, OUTPUT_DIM), jnp.float32)
    return (w1, b1, w2, b2, wfc, bfc)


def ref_forward(x, edge_index, params):
    """Pure-JAX f32 reference (same math, no Pallas, unpadded params)."""
    w1, b1, w2, b2, wfc, bfc = params
    adj = build_norm_adj(edge_index, x.shape[0])
    h1 = jnp.maximum(adj @ (x @ w1) + b1, 0.0)
    h2 = jnp.maximum(adj @ (h1 @ w2) + b2, 0.0)
    return (jnp.mean(h2, axis=0, keepdims=True) @ wfc + bfc).reshape(OUTPUT_DIM)


if __name__ == "__main__":
    key = jax.random.PRNGKey(0)
    kx, ke, kp = jax.random.split(key, 3)

    num_graphs = 8
    num_nodes = 8
    num_edges = 16

    x = jax.random.normal(kx, (num_graphs, num_nodes, INPUT_DIM), jnp.float32)
    edge_index = jax.random.randint(
        ke, (num_graphs, 2, num_edges), 0, num_nodes, jnp.int32)
    params = init_params(kp)

    y = gnn_forward_batched(x, edge_index, params)          # (G, OUTPUT_DIM)
    jax.block_until_ready(y)

    ref = jnp.stack([ref_forward(x[g], edge_index[g], params)
                     for g in range(num_graphs)], axis=0)
    # bf16 MXU operands -> relaxed tolerance vs. the f32 reference.
    assert jnp.allclose(y, ref, atol=2e-2, rtol=2e-2), (y, ref)

    # Single-graph path (matches the torch module's (output_dim,) output).
    y0 = gnn_forward(x[0], edge_index[0], params)
    jax.block_until_ready(y0)
    assert jnp.allclose(y0, ref[0], atol=2e-2, rtol=2e-2), (y0, ref[0])

    print("KERNEL_OK")
</pallas_src>

<mosaic_0001>
module attributes {stable_mosaic.version = 11 : i64} {
  func.func @gnn_kernel(%arg0: i32, %arg1: memref<1x32x32xbf16, #tpu.memory_space<vmem>>, %arg2: memref<1x32x2xf32, #tpu.memory_space<vmem>>, %arg3: memref<2x128xf32, #tpu.memory_space<vmem>>, %arg4: memref<1x128xf32, #tpu.memory_space<vmem>>, %arg5: memref<128x128xbf16, #tpu.memory_space<vmem>>, %arg6: memref<1x128xf32, #tpu.memory_space<vmem>>, %arg7: memref<4x32xf32, #tpu.memory_space<vmem>>, %arg8: memref<1x4x128xf32, #tpu.memory_space<vmem>>) attributes {dimension_semantics = [#tpu.dimension_semantics<parallel>], iteration_bounds = array<i64: 2>, scalar_prefetch = 0 : i64, scratch_operands = 0 : i64, tpu.core_type = #tpu.core_type<tc>, window_params = [{transform_indices = @transform_0, window_bounds = array<i64: 1, 32, 32>}, {transform_indices = @transform_1, window_bounds = array<i64: 1, 32, 2>}, {pipeline_mode = #tpu.pipeline_mode<synchronous>, transform_indices = @transform_2, window_bounds = array<i64: 2, 128>}, {pipeline_mode = #tpu.pipeline_mode<synchronous>, transform_indices = @transform_3, window_bounds = array<i64: 1, 128>}, {pipeline_mode = #tpu.pipeline_mode<synchronous>, transform_indices = @transform_4, window_bounds = array<i64: 128, 128>}, {pipeline_mode = #tpu.pipeline_mode<synchronous>, transform_indices = @transform_5, window_bounds = array<i64: 1, 128>}, {pipeline_mode = #tpu.pipeline_mode<synchronous>, transform_indices = @transform_6, window_bounds = array<i64: 4, 32>}, {transform_indices = @transform_7, window_bounds = array<i64: 1, 4, 128>}]} {
    %c0 = arith.constant 0 : index
    %c0_0 = arith.constant 0 : index
    %c0_1 = arith.constant 0 : index
    %0 = vector.load %arg1[%c0, %c0_0, %c0_1] : memref<1x32x32xbf16, #tpu.memory_space<vmem>>, vector<1x32x32xbf16>
    %1 = vector.shape_cast %0 : vector<1x32x32xbf16> to vector<32x32xbf16>
    %c0_2 = arith.constant 0 : index
    %c0_3 = arith.constant 0 : index
    %c0_4 = arith.constant 0 : index
    %2 = vector.load %arg2[%c0_2, %c0_3, %c0_4] : memref<1x32x2xf32, #tpu.memory_space<vmem>>, vector<1x32x2xf32>
    %3 = vector.shape_cast %2 : vector<1x32x2xf32> to vector<32x2xf32>
    %4 = vector.extract_strided_slice %3 {offsets = [0, 0], sizes = [32, 1], strides = [1, 1]} : vector<32x2xf32> to vector<32x1xf32>
    %c0_5 = arith.constant 0 : index
    %c0_6 = arith.constant 0 : index
    %5 = vector.load %arg3[%c0_5, %c0_6] : memref<2x128xf32, #tpu.memory_space<vmem>>, vector<1x128xf32>
    %6 = vector.broadcast %4 : vector<32x1xf32> to vector<32x128xf32>
    %7 = vector.broadcast %5 : vector<1x128xf32> to vector<32x128xf32>
    %8 = arith.mulf %6, %7 : vector<32x128xf32>
    %9 = vector.extract_strided_slice %3 {offsets = [0, 1], sizes = [32, 1], strides = [1, 1]} : vector<32x2xf32> to vector<32x1xf32>
    %c1 = arith.constant 1 : index
    %c0_7 = arith.constant 0 : index
    %10 = vector.load %arg3[%c1, %c0_7] : memref<2x128xf32, #tpu.memory_space<vmem>>, vector<1x128xf32>
    %11 = vector.broadcast %9 : vector<32x1xf32> to vector<32x128xf32>
    %12 = vector.broadcast %10 : vector<1x128xf32> to vector<32x128xf32>
    %13 = arith.mulf %11, %12 : vector<32x128xf32>
    %14 = arith.addf %8, %13 : vector<32x128xf32>
    %15 = arith.truncf %14 : vector<32x128xf32> to vector<32x128xbf16>
    %cst = arith.constant dense<0.000000e+00> : vector<32x128xf32>
    %16 = tpu.matmul %1, %15, %cst {dimension_numbers = #tpu.dot_dimension_numbers<[1], [0], [0], [1], [0, 0, 1, 1], [], []>} : vector<32x32xbf16>, vector<32x128xbf16>, vector<32x128xf32> -> vector<32x128xf32>
    %c0_8 = arith.constant 0 : index
    %c0_9 = arith.constant 0 : index
    %17 = vector.load %arg4[%c0_8, %c0_9] : memref<1x128xf32, #tpu.memory_space<vmem>>, vector<1x128xf32>
    %18 = vector.broadcast %17 : vector<1x128xf32> to vector<32x128xf32>
    %19 = arith.addf %16, %18 : vector<32x128xf32>
    %cst_10 = arith.constant 0.000000e+00 : f32
    %20 = vector.broadcast %cst_10 : f32 to vector<32x128xf32>
    %21 = arith.maximumf %19, %20 : vector<32x128xf32>
    %22 = arith.truncf %21 : vector<32x128xf32> to vector<32x128xbf16>
    %c0_11 = arith.constant 0 : index
    %c0_12 = arith.constant 0 : index
    %23 = vector.load %arg5[%c0_11, %c0_12] : memref<128x128xbf16, #tpu.memory_space<vmem>>, vector<128x128xbf16>
    %cst_13 = arith.constant dense<0.000000e+00> : vector<32x128xf32>
    %24 = tpu.matmul %22, %23, %cst_13 {dimension_numbers = #tpu.dot_dimension_numbers<[1], [0], [0], [1], [0, 0, 1, 1], [], []>} : vector<32x128xbf16>, vector<128x128xbf16>, vector<32x128xf32> -> vector<32x128xf32>
    %25 = arith.truncf %24 : vector<32x128xf32> to vector<32x128xbf16>
    %cst_14 = arith.constant dense<0.000000e+00> : vector<32x128xf32>
    %26 = tpu.matmul %1, %25, %cst_14 {dimension_numbers = #tpu.dot_dimension_numbers<[1], [0], [0], [1], [0, 0, 1, 1], [], []>} : vector<32x32xbf16>, vector<32x128xbf16>, vector<32x128xf32> -> vector<32x128xf32>
    %c0_15 = arith.constant 0 : index
    %c0_16 = arith.constant 0 : index
    %27 = vector.load %arg6[%c0_15, %c0_16] : memref<1x128xf32, #tpu.memory_space<vmem>>, vector<1x128xf32>
    %28 = vector.broadcast %27 : vector<1x128xf32> to vector<32x128xf32>
    %29 = arith.addf %26, %28 : vector<32x128xf32>
    %cst_17 = arith.constant 0.000000e+00 : f32
    %30 = vector.broadcast %cst_17 : f32 to vector<32x128xf32>
    %31 = arith.maximumf %29, %30 : vector<32x128xf32>
    %c0_18 = arith.constant 0 : index
    %c0_19 = arith.constant 0 : index
    %32 = vector.load %arg7[%c0_18, %c0_19] : memref<4x32xf32, #tpu.memory_space<vmem>>, vector<4x32xf32>
    %cst_20 = arith.constant dense<0.000000e+00> : vector<4x128xf32>
    %33 = tpu.matmul %32, %31, %cst_20 {dimension_numbers = #tpu.dot_dimension_numbers<[1], [0], [0], [1], [0, 0, 1, 1], [], []>} : vector<4x32xf32>, vector<32x128xf32>, vector<4x128xf32> -> vector<4x128xf32>
    %c0_21 = arith.constant 0 : index
    %c0_22 = arith.constant 0 : index
    %c0_23 = arith.constant 0 : index
    %34 = vector.load %arg8[%c0_21, %c0_22, %c0_23] : memref<1x4x128xf32, #tpu.memory_space<vmem>>, vector<1x4x128xf32>
    %35 = vector.shape_cast %34 : vector<1x4x128xf32> to vector<4x128xf32>
    %36 = vector.shape_cast %33 : vector<4x128xf32> to vector<1x4x128xf32>
    tpu.vector_store %arg8[%c0_21, %c0_22, %c0_23], %36 {strides = array<i32>} : memref<1x4x128xf32, #tpu.memory_space<vmem>>, vector<1x4x128xf32>,
    return
  }
  func.func @transform_0(%arg0: i32) -> (i32, i32, i32) {
    %c0_i32 = arith.constant 0 : i32
    %c0_i32_0 = arith.constant 0 : i32
    %c0_i32_1 = arith.constant 0 : i32
    return %arg0, %c0_i32, %c0_i32_0 : i32, i32, i32
  }
  func.func @transform_1(%arg0: i32) -> (i32, i32, i32) {
    %c0_i32 = arith.constant 0 : i32
    %c0_i32_0 = arith.constant 0 : i32
    %c0_i32_1 = arith.constant 0 : i32
    return %arg0, %c0_i32, %c0_i32_0 : i32, i32, i32
  }
  func.func @transform_2(%arg0: i32) -> (i32, i32) {
    %c0_i32 = arith.constant 0 : i32
    %c0_i32_0 = arith.constant 0 : i32
    %c0_i32_1 = arith.constant 0 : i32
    return %c0_i32, %c0_i32_0 : i32, i32
  }
  func.func @transform_3(%arg0: i32) -> (i32, i32) {
    %c0_i32 = arith.constant 0 : i32
    %c0_i32_0 = arith.constant 0 : i32
    %c0_i32_1 = arith.constant 0 : i32
    return %c0_i32, %c0_i32_0 : i32, i32
  }
  func.func @transform_4(%arg0: i32) -> (i32, i32) {
    %c0_i32 = arith.constant 0 : i32
    %c0_i32_0 = arith.constant 0 : i32
    %c0_i32_1 = arith.constant 0 : i32
    return %c0_i32, %c0_i32_0 : i32, i32
  }
  func.func @transform_5(%arg0: i32) -> (i32, i32) {
    %c0_i32 = arith.constant 0 : i32
    %c0_i32_0 = arith.constant 0 : i32
    %c0_i32_1 = arith.constant 0 : i32
    return %c0_i32, %c0_i32_0 : i32, i32
  }
  func.func @transform_6(%arg0: i32) -> (i32, i32) {
    %c0_i32 = arith.constant 0 : i32
    %c0_i32_0 = arith.constant 0 : i32
    %c0_i32_1 = arith.constant 0 : i32
    return %c0_i32, %c0_i32_0 : i32, i32
  }
  func.func @transform_7(%arg0: i32) -> (i32, i32, i32) {
    %c0_i32 = arith.constant 0 : i32
    %c0_i32_0 = arith.constant 0 : i32
    %c0_i32_1 = arith.constant 0 : i32
    return %arg0, %c0_i32, %c0_i32_0 : i32, i32, i32
  }
}

</mosaic_0001>

<llo_original>
// kernel: tpu_custom_call.1
$region0: #{tpu_custom_call.1}
  #allocation0 [shape = 'u32[]', space=smem, size = 0x4, offset = 0x4, fixed_abs, tag = 'smem constant byte address 0x4 - core index']
  #allocation1 [shape = 'u32[144,128]{1,0:T(1,128)}', space=vmem, size = 0x12000, scoped, tag = 'internal scratch']
  %s0 = inlined_call_operand.hbm [shape: bf16[2,32,32], index: 0, kind: input, shape index: {}]
  %s1 = inlined_call_operand.vmem [shape: f32[2,32,2], index: 1, kind: input, shape index: {}]
  %s2 = inlined_call_operand.vmem [shape: f32[2,128], index: 2, kind: input, shape index: {}]
  %s3 = inlined_call_operand.vmem [shape: f32[1,128], index: 3, kind: input, shape index: {}]
  %s4 = inlined_call_operand.vmem [shape: bf16[128,128], index: 4, kind: input, shape index: {}]
  %s5 = inlined_call_operand.vmem [shape: f32[1,128], index: 5, kind: input, shape index: {}]
  %s6 = inlined_call_operand.vmem [shape: f32[4,32], index: 6, kind: input, shape index: {}]
  %s7 = inlined_call_operand.hbm [shape: f32[2,4,128], index: 7, kind: output, shape index: {}]
  %s8 = sld [smem:[#allocation0]]
  $region65: #{tpu_custom_call.1} parent=0
    _
  %s10 = ssub.s32 1, %s8
  %s11 = scalar_select 0, %s10, %s8
  $region1: #{tpu_custom_call.1} parent=0
    #allocation2 [shape = 'u8[16384]{0}', space=vmem, size = 0x4000, scoped, tag = 'input window, operand 0']
    #allocation3 [shape = 's32[2]{0}', space=sflag, size = 0x8, scoped, tag = 'scoped memory for tpu_custom_call.1']
    #allocation4 [shape = 's32[2]{0}', space=sflag, size = 0x8, scoped, tag = 'scoped memory for tpu_custom_call.1']
    #allocation5 [shape = 'u8[4096]{0}', space=vmem, size = 0x1000, scoped, tag = 'output window, operand 0']
    %12 = vsyncpa [#allocation3], 0
    %s13 = scalar_lea.sflag [#allocation3], 1
    %14 = vsyncpa %s13, 0
    %15 = vsyncpa [#allocation4], 0
    %s16 = scalar_lea.sflag [#allocation4], 1
    %17 = vsyncpa %s16, 0
    loop: start=0, step=1, limit=4
    $region2: #{tpu_custom_call.1} parent=1 // loop_pre_header
      _
    $region3: #{tpu_custom_call.1} parent=1 // loop_header
      %s19 = sphi 0, %s23
      %p20 = scmp.ge.s32.totalorder %s19, 4
      %s29 = sphi 0, %s31
      %s32 = sphi 0, %s29
      %s33 = sphi 0, %s32
      %s49 = sphi 0, %s33
      %s55 = sphi 0, %s57
      %s58 = sphi 0, %s55
      %s59 = sphi 0, %s58
      %s75 = sphi 0, %s59
      %s79 = sphi 0, %s79
      %s81 = sphi 0, %s79
      %s82 = sphi 0, %s81
      %s96 = sphi 0, %s82
      %s100 = sphi 0, %s100
      %s102 = sphi 0, %s100
      %s103 = sphi 0, %s102
      %s117 = sphi 0, %s103
      %s121 = sphi 0, %s121
      %s123 = sphi 0, %s121
      %s124 = sphi 0, %s123
      %s138 = sphi 0, %s124
      %s142 = sphi 0, %s142
      %s144 = sphi 0, %s142
      %s145 = sphi 0, %s144
      %s159 = sphi 0, %s145
      %s163 = sphi 0, %s163
      %s165 = sphi 0, %s163
      %s166 = sphi 0, %s165
      %s180 = sphi 0, %s166
      %s186 = sphi 0, %s188
      %s189 = sphi 0, %s186
      %s190 = sphi 0, %s189
      %s206 = sphi 0, %s190
    $region4: #{tpu_custom_call.1} parent=1 // loop_header_branch
      %22 = sbr.rel (%p20) target = $region8
    $region5: #{tpu_custom_call.1} parent=1 // loop_body
      %s24 = ssub.s32 %s19, 1
      %s25 = ssub.s32 %s19, 2
      %s26 = sadd.s32 %s19, 1
      %s27 = ssub.s32 %s19, %s26
      %p28 = scmp.eq.s32.totalorder %s27, 0
      %s30 = sadd.s32 %s29, 1
      %s31 = scalar_select %p28, %s29, %s30
      %p34 = pneg %p28
      %p35 = scmp.eq.s32.totalorder %s19, 1
      %p36 = por %p34, %p35
      %p37 = scmp.ne.s32.totalorder %s29, %s32
      %p38 = scmp.eq.s32.totalorder %s19, 0
      %p39 = por %p37, %p38
      %p40 = scmp.ne.s32.totalorder %s29, %s32
      %p41 = scmp.eq.s32.totalorder %s24, 1
      %p42 = por %p40, %p41
      %p43 = scmp.ne.s32.totalorder %s32, %s33
      %p44 = scmp.eq.s32.totalorder %s24, 0
      %p45 = por %p43, %p44
      %p46 = scmp.ne.s32.totalorder %s32, %s33
      %p47 = scmp.eq.s32.totalorder %s25, 1
      %p48 = por %p46, %p47
      %p50 = scmp.ne.s32.totalorder %s33, %s49
      %p51 = scmp.eq.s32.totalorder %s25, 0
      %p52 = por %p50, %p51
      %s53 = ssub.s32 %s19, %s26
      %p54 = scmp.eq.s32.totalorder %s53, 0
      %s56 = sadd.s32 %s55, 1
      %s57 = scalar_select %p54, %s55, %s56
      %p60 = pneg %p54
      %p61 = scmp.eq.s32.totalorder %s19, 1
      %p62 = por %p60, %p61
      %p63 = scmp.ne.s32.totalorder %s55, %s58
      %p64 = scmp.eq.s32.totalorder %s19, 0
      %p65 = por %p63, %p64
      %p66 = scmp.ne.s32.totalorder %s55, %s58
      %p67 = scmp.eq.s32.totalorder %s24, 1
      %p68 = por %p66, %p67
      %p69 = scmp.ne.s32.totalorder %s58, %s59
      %p70 = scmp.eq.s32.totalorder %s24, 0
      %p71 = por %p69, %p70
      %p72 = scmp.ne.s32.totalorder %s58, %s59
      %p73 = scmp.eq.s32.totalorder %s25, 1
      %p74 = por %p72, %p73
      %p76 = scmp.ne.s32.totalorder %s59, %s75
      %p77 = scmp.eq.s32.totalorder %s25, 0
      %p78 = por %p76, %p77
      %s80 = sadd.s32 %s79, 1
      %p83 = scmp.eq.s32.totalorder %s19, 1
      %p84 = scmp.ne.s32.totalorder %s79, %s81
      %p85 = scmp.eq.s32.totalorder %s19, 0
      %p86 = por %p84, %p85
      %p87 = scmp.ne.s32.totalorder %s79, %s81
      %p88 = scmp.eq.s32.totalorder %s24, 1
      %p89 = por %p87, %p88
      %p90 = scmp.ne.s32.totalorder %s81, %s82
      %p91 = scmp.eq.s32.totalorder %s24, 0
      %p92 = por %p90, %p91
      %p93 = scmp.ne.s32.totalorder %s81, %s82
      %p94 = scmp.eq.s32.totalorder %s25, 1
      %p95 = por %p93, %p94
      %p97 = scmp.ne.s32.totalorder %s82, %s96
      %p98 = scmp.eq.s32.totalorder %s25, 0
      %p99 = por %p97, %p98
      %s101 = sadd.s32 %s100, 1
      %p104 = scmp.eq.s32.totalorder %s19, 1
      %p105 = scmp.ne.s32.totalorder %s100, %s102
      %p106 = scmp.eq.s32.totalorder %s19, 0
      %p107 = por %p105, %p106
      %p108 = scmp.ne.s32.totalorder %s100, %s102
      %p109 = scmp.eq.s32.totalorder %s24, 1
      %p110 = por %p108, %p109
      %p111 = scmp.ne.s32.totalorder %s102, %s103
      %p112 = scmp.eq.s32.totalorder %s24, 0
      %p113 = por %p111, %p112
      %p114 = scmp.ne.s32.totalorder %s102, %s103
      %p115 = scmp.eq.s32.totalorder %s25, 1
      %p116 = por %p114, %p115
      %p118 = scmp.ne.s32.totalorder %s103, %s117
      %p119 = scmp.eq.s32.totalorder %s25, 0
      %p120 = por %p118, %p119
      %s122 = sadd.s32 %s121, 1
      %p125 = scmp.eq.s32.totalorder %s19, 1
      %p126 = scmp.ne.s32.totalorder %s121, %s123
      %p127 = scmp.eq.s32.totalorder %s19, 0
      %p128 = por %p126, %p127
      %p129 = scmp.ne.s32.totalorder %s121, %s123
      %p130 = scmp.eq.s32.totalorder %s24, 1
      %p131 = por %p129, %p130
      %p132 = scmp.ne.s32.totalorder %s123, %s124
      %p133 = scmp.eq.s32.totalorder %s24, 0
      %p134 = por %p132, %p133
      %p135 = scmp.ne.s32.totalorder %s123, %s124
      %p136 = scmp.eq.s32.totalorder %s25, 1
      %p137 = por %p135, %p136
      %p139 = scmp.ne.s32.totalorder %s124, %s138
      %p140 = scmp.eq.s32.totalorder %s25, 0
      %p141 = por %p139, %p140
      %s143 = sadd.s32 %s142, 1
      %p146 = scmp.eq.s32.totalorder %s19, 1
      %p147 = scmp.ne.s32.totalorder %s142, %s144
      %p148 = scmp.eq.s32.totalorder %s19, 0
      %p149 = por %p147, %p148
      %p150 = scmp.ne.s32.totalorder %s142, %s144
      %p151 = scmp.eq.s32.totalorder %s24, 1
      %p152 = por %p150, %p151
      %p153 = scmp.ne.s32.totalorder %s144, %s145
      %p154 = scmp.eq.s32.totalorder %s24, 0
      %p155 = por %p153, %p154
      %p156 = scmp.ne.s32.totalorder %s144, %s145
      %p157 = scmp.eq.s32.totalorder %s25, 1
      %p158 = por %p156, %p157
      %p160 = scmp.ne.s32.totalorder %s145, %s159
      %p161 = scmp.eq.s32.totalorder %s25, 0
      %p162 = por %p160, %p161
      %s164 = sadd.s32 %s163, 1
      %p167 = scmp.eq.s32.totalorder %s19, 1
      %p168 = scmp.ne.s32.totalorder %s163, %s165
      %p169 = scmp.eq.s32.totalorder %s19, 0
      %p170 = por %p168, %p169
      %p171 = scmp.ne.s32.totalorder %s163, %s165
      %p172 = scmp.eq.s32.totalorder %s24, 1
      %p173 = por %p171, %p172
      %p174 = scmp.ne.s32.totalorder %s165, %s166
      %p175 = scmp.eq.s32.totalorder %s24, 0
      %p176 = por %p174, %p175
      %p177 = scmp.ne.s32.totalorder %s165, %s166
      %p178 = scmp.eq.s32.totalorder %s25, 1
      %p179 = por %p177, %p178
      %p181 = scmp.ne.s32.totalorder %s166, %s180
      %p182 = scmp.eq.s32.totalorder %s25, 0
      %p183 = por %p181, %p182
      %s184 = ssub.s32 %s19, %s26
      %p185 = scmp.eq.s32.totalorder %s184, 0
      %s187 = sadd.s32 %s186, 1
      %s188 = scalar_select %p185, %s186, %s187
      %p191 = pneg %p185
      %p192 = scmp.eq.s32.totalorder %s19, 1
      %p193 = por %p191, %p192
      %p194 = scmp.ne.s32.totalorder %s186, %s189
      %p195 = scmp.eq.s32.totalorder %s19, 0
      %p196 = por %p194, %p195
      %p197 = scmp.ne.s32.totalorder %s186, %s189
      %p198 = scmp.eq.s32.totalorder %s24, 1
      %p199 = por %p197, %p198
      %p200 = scmp.ne.s32.totalorder %s189, %s190
      %p201 = scmp.eq.s32.totalorder %s24, 0
      %p202 = por %p200, %p201
      %p203 = scmp.ne.s32.totalorder %s189, %s190
      %p204 = scmp.eq.s32.totalorder %s25, 1
      %p205 = por %p203, %p204
      %p207 = scmp.ne.s32.totalorder %s190, %s206
      %p208 = scmp.eq.s32.totalorder %s25, 0
      %p209 = por %p207, %p208
      %p210 = scmp.le.s32.totalorder 1, %s19
      %p211 = scmp.lt.s32.totalorder %s19, 3
      %p212 = pnand %p210, %p211
      %p213 = pneg %p212
      // Predicated region
      $region9: #{tpu_custom_call.1} parent=5 // pred_check
        _
      $region10: #{tpu_custom_call.1} parent=5 // pred_check_branch
        %215 = sbr.rel (%p212) target = $region12
      $region11: #{tpu_custom_call.1} parent=5 // pred_region
        %s216 = ssub.s32 %s19, 1
        // Predicated region
        $region13: #{tpu_custom_call.1} parent=11 // pred_check
          %p217 = pneg %p92
        $region14: #{tpu_custom_call.1} parent=11 // pred_check_branch
          %219 = sbr.rel (%p217) target = $region16
        $region15: #{tpu_custom_call.1} parent=11 // pred_region
          _
        $region16: #{tpu_custom_call.1} parent=11 // pred_fallthru
          _
        // Predicated region
        $region17: #{tpu_custom_call.1} parent=11 // pred_check
          %p220 = pneg %p113
        $region18: #{tpu_custom_call.1} parent=11 // pred_check_branch
          %222 = sbr.rel (%p220) target = $region20
        $region19: #{tpu_custom_call.1} parent=11 // pred_region
          _
        $region20: #{tpu_custom_call.1} parent=11 // pred_fallthru
          _
        // Predicated region
        $region21: #{tpu_custom_call.1} parent=11 // pred_check
          %p223 = pneg %p134
        $region22: #{tpu_custom_call.1} parent=11 // pred_check_branch
          %225 = sbr.rel (%p223) target = $region24
        $region23: #{tpu_custom_call.1} parent=11 // pred_region
          _
        $region24: #{tpu_custom_call.1} parent=11 // pred_fallthru
          _
        // Predicated region
        $region25: #{tpu_custom_call.1} parent=11 // pred_check
          %p226 = pneg %p155
        $region26: #{tpu_custom_call.1} parent=11 // pred_check_branch
          %228 = sbr.rel (%p226) target = $region28
        $region27: #{tpu_custom_call.1} parent=11 // pred_region
          _
        $region28: #{tpu_custom_call.1} parent=11 // pred_fallthru
          _
        // Predicated region
        $region29: #{tpu_custom_call.1} parent=11 // pred_check
          %p229 = pneg %p176
        $region30: #{tpu_custom_call.1} parent=11 // pred_check_branch
          %231 = sbr.rel (%p229) target = $region32
        $region31: #{tpu_custom_call.1} parent=11 // pred_region
          _
        $region32: #{tpu_custom_call.1} parent=11 // pred_fallthru
          _
      $region12: #{tpu_custom_call.1} parent=5 // pred_fallthru
        _
      %p232 = scmp.lt.s32.totalorder %s19, 2
      // Predicated region
      $region33: #{tpu_custom_call.1} parent=5 // pred_check
        %p233 = pneg %p232
      $region34: #{tpu_custom_call.1} parent=5 // pred_check_branch
        %235 = sbr.rel (%p233) target = $region36
      $region35: #{tpu_custom_call.1} parent=5 // pred_region
        // Predicated region
        $region37: #{tpu_custom_call.1} parent=35 // pred_check
          %p236 = pneg %p39
        $region38: #{tpu_custom_call.1} parent=35 // pred_check_branch
          %238 = sbr.rel (%p236) target = $region40
        $region39: #{tpu_custom_call.1} parent=35 // pred_region
          %s239 = sand.u32 %s29, 1
          %s240 = scalar_lea.sflag [#allocation3], %s239
          %s241 = sand.u32 %s29, 1
          %s242 = smul.addr %s241, 16
          %s243 = scalar_lea.vmem [#allocation2], %s242
          %s245 = ssub.s32 256, 256
          %246 = vsyncadd %s240, %s245
          %s247 = smul.addr %s19, 4
          %s248 = smul.addr %s247, 64
          %s249 = scalar_lea.hbm %s0, %s248
          %s250 = sshll.u32 %s243, 4
          %s251 = int_to_ptr.vmem [resolvable:$true] %s250
          %256 = dma.hbm_to_vmem [thread:$0]  %s249, 256, %s251, %s240, 64, 64, 4
        $region40: #{tpu_custom_call.1} parent=35 // pred_fallthru
          _
        // Predicated region
        $region41: #{tpu_custom_call.1} parent=35 // pred_check
          %p257 = pneg %p65
        $region42: #{tpu_custom_call.1} parent=35 // pred_check_branch
          %259 = sbr.rel (%p257) target = $region44
        $region43: #{tpu_custom_call.1} parent=35 // pred_region
          %p260 = scmp.lt.s32.totalorder %s19, 1
          %s261 = scalar_select %p260, %s19, 1
          %s262 = smul.addr %s261, 4
          %s263 = smul.addr %s262, 8
          %s264 = scalar_lea.vmem %s1, %s263
        $region44: #{tpu_custom_call.1} parent=35 // pred_fallthru
          _
      $region36: #{tpu_custom_call.1} parent=5 // pred_fallthru
        _
      %p265 = scmp.le.s32.totalorder 1, %s19
      %p266 = scmp.lt.s32.totalorder %s19, 3
      %p267 = pnand %p265, %p266
      %p268 = pneg %p267
      // Predicated region
      $region45: #{tpu_custom_call.1} parent=5 // pred_check
        _
      $region46: #{tpu_custom_call.1} parent=5 // pred_check_branch
        %270 = sbr.rel (%p267) target = $region48
      $region47: #{tpu_custom_call.1} parent=5 // pred_region
        %s271 = ssub.s32 %s19, 1
        %s272 = sand.u32 %s32, 1
        %s273 = scalar_lea.sflag [#allocation3], %s272
        %s274 = sand.u32 %s32, 1
        %s275 = smul.addr %s274, 16
        %s276 = scalar_lea.vmem [#allocation2], %s275
        // Predicated region
        $region49: #{tpu_custom_call.1} parent=47 // pred_check
          %p277 = pneg %p45
        $region50: #{tpu_custom_call.1} parent=47 // pred_check_branch
          %279 = sbr.rel (%p277) target = $region52
        $region51: #{tpu_custom_call.1} parent=47 // pred_region
          %280 = dma.done %s273, 256
        $region52: #{tpu_custom_call.1} parent=47 // pred_fallthru
          _
        %s281 = sand.u32 %s32, 1
        %s282 = scalar_lea.sflag [#allocation3], %s281
        %s283 = sand.u32 %s32, 1
        %s284 = smul.addr %s283, 16
        %s285 = scalar_lea.vmem [#allocation2], %s284
        %p286 = pneg %p45
        %p287 = pneg %p42
        %p288 = scmp.lt.s32.totalorder %s24, 1
        %s289 = scalar_select %p288, %s24, 1
        %s290 = smul.addr %s289, 4
        %s291 = smul.addr %s290, 8
        %s292 = scalar_lea.vmem %s1, %s291
        %p293 = pneg %p71
        %p294 = pneg %p68
        %p295 = pneg %p92
        %p296 = pneg %p89
        %p297 = pneg %p113
        %p298 = pneg %p110
        %p299 = pneg %p134
        %p300 = pneg %p131
        %p301 = pneg %p155
        %p302 = pneg %p152
        %p303 = pneg %p176
        %p304 = pneg %p173
        %p305 = pneg %p202
        %p306 = pneg %p199
        %s307 = sand.u32 %s189, 1
        %s308 = scalar_lea.sflag [#allocation4], %s307
        %s309 = sand.u32 %s189, 1
        %s310 = smul.addr %s309, 4
        %s311 = scalar_lea.vmem [#allocation5], %s310
        %p312 = scmp.lt.s32.totalorder %s24, 1
        %s313 = scalar_select %p312, %s24, 1
        %s314 = smul.addr %s313, 4
        %s315 = smul.addr %s314, 8
        %s316 = scalar_lea.vmem %s1, %s315
        %v318 = vld [vmem:[%s276] sm:$0xf]
        %v319 = vld [vmem:[%s276 + $0x4] sm:$0xf]
        %v320 = vld [vmem:[%s276 + $0x8] sm:$0xf]
        %v321 = vld [vmem:[%s276 + $0xc] sm:$0xf]
        %v322 = vld [vmem:[%s316] sm:$0xff]
        %v323 = vld [vmem:[%s316 + $0x8] sm:$0xff]
        %v324 = vld [vmem:[%s316 + $0x10] sm:$0xff]
        %v325 = vld [vmem:[%s316 + $0x18] sm:$0xff]
        %v326 = vld [vmem:[%s2] sm:$0x1]
        %328 = vset.pattern.permute.xlu0 0
        %329 = vperm.xlu0 %328, %v322
        %v330 = vpop.permute.xlu0 %329
        %333 = vset.pattern.permute.xlu0 0
        %334 = vperm.xlu0 %333, %v323
        %v335 = vpop.permute.xlu0 %334
        %338 = vset.pattern.permute.xlu0 0
        %339 = vperm.xlu0 %338, %v324
        %v340 = vpop.permute.xlu0 %339
        %343 = vset.pattern.permute.xlu0 0
        %344 = vperm.xlu0 %343, %v325
        %v345 = vpop.permute.xlu0 %344
        %v347 = vlaneseq
        %v348 = vshrl.u32 %v347, 7
        %v349 = vsub.s32 0, %v348
        %v350 = vrot.slane %v326, %v349
        %v351 = vmul.f32 %v330, %v350
        %v352 = vmul.f32 %v335, %v350
        %v353 = vmul.f32 %v340, %v350
        %v354 = vmul.f32 %v345, %v350
        %v355 = vld [vmem:[%s2 + $0x1] sm:$0x1]
        %356 = vset.pattern.permute.xlu0 1
        %357 = vperm.xlu0 %356, %v322
        %v358 = vpop.permute.xlu0 %357
        %360 = vset.pattern.permute.xlu0 1
        %361 = vperm.xlu0 %360, %v323
        %v362 = vpop.permute.xlu0 %361
        %364 = vset.pattern.permute.xlu0 1
        %365 = vperm.xlu0 %364, %v324
        %v366 = vpop.permute.xlu0 %365
        %368 = vset.pattern.permute.xlu0 1
        %369 = vperm.xlu0 %368, %v325
        %v370 = vpop.permute.xlu0 %369
        %v372 = vlaneseq
        %v373 = vshrl.u32 %v372, 7
        %v374 = vsub.s32 0, %v373
        %v375 = vrot.slane %v355, %v374
        %v376 = vmul.f32 %v358, %v375
        %v377 = vmul.f32 %v362, %v375
        %v378 = vmul.f32 %v366, %v375
        %v379 = vmul.f32 %v370, %v375
        %v380 = vadd.f32 %v351, %v376
        %v381 = vadd.f32 %v352, %v377
        %v382 = vadd.f32 %v353, %v378
        %v383 = vadd.f32 %v354, %v379
        %v384 = vpack.c.bf16 %v381, %v380
        %v385 = vpack.c.bf16 %v383, %v382
        %v386 = vld [vmem:[%s3] sm:$0x1]
        %v388 = vlaneseq
        %v389 = vshrl.u32 %v388, 7
        %v390 = vsub.s32 0, %v389
        %v391 = vrot.slane %v386, %v390
        %v397 = vunpack.c.l.b16 %v318
        %v398 = vunpack.c.l.b16 %v319
        %v399 = vunpack.c.l.b16 %v320
        %v400 = vunpack.c.l.b16 %v321
        %v401 = vpack.c.b16 %v398, %v397
        %v402 = vpack.c.b16 %v400, %v399
        %vm403 = vcmask 261120
        %v405 = vsel %vm403, %v401, 0
        %v408 = vsel %vm403, %v402, 0
        %410 = vmatprep.subr.bf16.mxu0 0
        %411 = vmatpush1.bf16.msra.mxu0 0
        %412 = vmatprep.subr.bf16.mxu0 0
        %413 = vmatpush1.bf16.msra.mxu0 0
        %414 = vmatprep.subr.bf16.mxu0 0
        %415 = vmatpush1.bf16.msra.mxu0 0
        %416 = vmatprep.subr.bf16.mxu0 0
        %417 = vmatpush1.bf16.msra.mxu0 0
        %418 = vmatprep.subr.bf16.mxu0 0
        %419 = vmatpush1.bf16.msra.mxu0 0
        %420 = vmatprep.subr.bf16.mxu0 0
        %421 = vmatpush1.bf16.msra.mxu0 0
        %422 = vmatprep.subr.bf16.mxu0 0
        %423 = vmatpush1.bf16.msra.mxu0 %v385
        %424 = vmatprep.subr.bf16.mxu0 0
        %425 = vmatpush1.bf16.msra.mxu0 %v384
        %426 = vmatprep.subr.bf16.mxu0 0
        %427 = vmatpush2.bf16.msra.mxu0 0
        %428 = vmatprep.subr.bf16.mxu0 0
        %429 = vmatpush2.bf16.msra.mxu0 0
        %430 = vmatprep.subr.bf16.mxu0 0
        %431 = vmatpush2.bf16.msra.mxu0 0
        %432 = vmatprep.subr.bf16.mxu0 0
        %433 = vmatpush2.bf16.msra.mxu0 0
        %434 = vmatprep.subr.bf16.mxu0 0
        %435 = vmatpush2.bf16.msra.mxu0 0
        %436 = vmatprep.subr.bf16.mxu0 0
        %437 = vmatpush2.bf16.msra.mxu0 0
        %438 = vmatprep.subr.bf16.mxu0 0
        %439 = vmatpush2.bf16.msra.mxu0 0
        %440 = vmatprep.subr.bf16.mxu0 0
        %441 = vmatpush2.bf16.msra.mxu0 0
        %442 = vmatprep.mubr.bf16.mxu0 0
        %443 = vmatmul.mubr.bf16.gmra.mxu0 %v405
        %v444 = vpop.f32.mrf.mxu0
        %v445 = vadd.f32 %v391, %v444
        %v446 = vpop.f32.mrf.mxu0
        %v447 = vpop.f32.mrf.mxu0
        %v448 = vadd.f32 %v391, %v447
        %v449 = vpop.f32.mrf.mxu0
        %450 = vmatprep.mubr.bf16.mxu0 0
        %451 = vmatmul.mubr.bf16.gmra.mxu0 %v408
        %v452 = vpop.f32.mrf.mxu0
        %v453 = vadd.f32 %v391, %v452
        %v454 = vpop.f32.mrf.mxu0
        %v455 = vpop.f32.mrf.mxu0
        %v456 = vadd.f32 %v391, %v455
        %v457 = vpop.f32.mrf.mxu0
        %458 = vdwg.mxu0
        %v459 = vmax.f32 %v445, 0.0
        %v460 = vmax.f32 %v448, 0.0
        %v461 = vmax.f32 %v453, 0.0
        %v462 = vmax.f32 %v456, 0.0
        %v463 = vpack.c.bf16 %v460, %v459
        %v464 = vpack.c.bf16 %v462, %v461
        %v465 = vld [vmem:[%s4] sm:$0xf]
        %v466 = vld [vmem:[%s4 + $0x4] sm:$0xf]
        %v467 = vld [vmem:[%s4 + $0x8] sm:$0xf]
        %v468 = vld [vmem:[%s4 + $0xc] sm:$0xf]
        %v469 = vld [vmem:[%s4 + $0x10] sm:$0xf]
        %v470 = vld [vmem:[%s4 + $0x14] sm:$0xf]
        %v471 = vld [vmem:[%s4 + $0x18] sm:$0xf]
        %v472 = vld [vmem:[%s4 + $0x1c] sm:$0xf]
        %v473 = vld [vmem:[%s4 + $0x20] sm:$0xf]
        %v474 = vld [vmem:[%s4 + $0x24] sm:$0xf]
        %v475 = vld [vmem:[%s4 + $0x28] sm:$0xf]
        %v476 = vld [vmem:[%s4 + $0x2c] sm:$0xf]
        %v477 = vld [vmem:[%s4 + $0x30] sm:$0xf]
        %v478 = vld [vmem:[%s4 + $0x34] sm:$0xf]
        %v479 = vld [vmem:[%s4 + $0x38] sm:$0xf]
        %v480 = vld [vmem:[%s4 + $0x3c] sm:$0xf]
        %v497 = vunpack.c.l.b16 %v465
        %v498 = vunpack.c.l.b16 %v466
        %v499 = vunpack.c.l.b16 %v467
        %v500 = vunpack.c.l.b16 %v468
        %v501 = vunpack.c.l.b16 %v469
        %v502 = vunpack.c.l.b16 %v470
        %v503 = vunpack.c.l.b16 %v471
        %v504 = vunpack.c.l.b16 %v472
        %v505 = vunpack.c.l.b16 %v473
        %v506 = vunpack.c.l.b16 %v474
        %v507 = vunpack.c.l.b16 %v475
        %v508 = vunpack.c.l.b16 %v476
        %v509 = vunpack.c.l.b16 %v477
        %v510 = vunpack.c.l.b16 %v478
        %v511 = vunpack.c.l.b16 %v479
        %v512 = vunpack.c.l.b16 %v480
        %v513 = vpack.c.b16 %v498, %v497
        %v514 = vpack.c.b16 %v500, %v499
        %v515 = vpack.c.b16 %v502, %v501
        %v516 = vpack.c.b16 %v504, %v503
        %v517 = vpack.c.b16 %v506, %v505
        %v518 = vpack.c.b16 %v508, %v507
        %v519 = vpack.c.b16 %v510, %v509
        %v520 = vpack.c.b16 %v512, %v511
        %529 = vmatprep.subr.bf16.mxu0 0
        %530 = vmatpush1.bf16.msra.mxu0 %v520
        %531 = vmatprep.subr.bf16.mxu0 0
        %532 = vmatpush1.bf16.msra.mxu0 %v519
        %533 = vmatprep.subr.bf16.mxu0 0
        %534 = vmatpush1.bf16.msra.mxu0 %v518
        %535 = vmatprep.subr.bf16.mxu0 0
        %536 = vmatpush1.bf16.msra.mxu0 %v517
        %537 = vmatprep.subr.bf16.mxu0 0
        %538 = vmatpush1.bf16.msra.mxu0 %v516
        %539 = vmatprep.subr.bf16.mxu0 0
        %540 = vmatpush1.bf16.msra.mxu0 %v515
        %541 = vmatprep.subr.bf16.mxu0 0
        %542 = vmatpush1.bf16.msra.mxu0 %v514
        %543 = vmatprep.subr.bf16.mxu0 0
        %544 = vmatpush1.bf16.msra.mxu0 %v513
        %545 = vmatprep.subr.bf16.mxu0 0
        %546 = vmatpush2.bf16.msra.mxu0 0
        %547 = vmatprep.subr.bf16.mxu0 0
        %548 = vmatpush2.bf16.msra.mxu0 0
        %549 = vmatprep.subr.bf16.mxu0 0
        %550 = vmatpush2.bf16.msra.mxu0 0
        %551 = vmatprep.subr.bf16.mxu0 0
        %552 = vmatpush2.bf16.msra.mxu0 0
        %553 = vmatprep.subr.bf16.mxu0 0
        %554 = vmatpush2.bf16.msra.mxu0 0
        %555 = vmatprep.subr.bf16.mxu0 0
        %556 = vmatpush2.bf16.msra.mxu0 0
        %557 = vmatprep.subr.bf16.mxu0 0
        %558 = vmatpush2.bf16.msra.mxu0 0
        %559 = vmatprep.subr.bf16.mxu0 0
        %560 = vmatpush2.bf16.msra.mxu0 0
        %561 = vmatprep.mubr.bf16.mxu0 0
        %562 = vmatmul.mubr.bf16.gmra.mxu0 %v463
        %v563 = vpop.f32.mrf.mxu0
        %v564 = vadd.f32 0.0, %v563
        %v565 = vpop.f32.mrf.mxu0
        %v566 = vpop.f32.mrf.mxu0
        %v567 = vadd.f32 0.0, %v566
        %v568 = vpop.f32.mrf.mxu0
        %569 = vmatprep.mubr.bf16.mxu0 0
        %570 = vmatmul.mubr.bf16.gmra.mxu0 %v464
        %v571 = vpop.f32.mrf.mxu0
        %v572 = vadd.f32 0.0, %v571
        %v573 = vpop.f32.mrf.mxu0
        %v574 = vpop.f32.mrf.mxu0
        %v575 = vadd.f32 0.0, %v574
        %v576 = vpop.f32.mrf.mxu0
        %577 = vdwg.mxu0
        %v578 = vpack.c.bf16 %v567, %v564
        %v579 = vpack.c.bf16 %v575, %v572
        %v580 = vld [vmem:[%s5] sm:$0x1]
        %v582 = vlaneseq
        %v583 = vshrl.u32 %v582, 7
        %v584 = vsub.s32 0, %v583
        %v585 = vrot.slane %v580, %v584
        %587 = vmatprep.subr.bf16.mxu0 0
        %588 = vmatpush1.bf16.msra.mxu0 0
        %589 = vmatprep.subr.bf16.mxu0 0
        %590 = vmatpush1.bf16.msra.mxu0 0
        %591 = vmatprep.subr.bf16.mxu0 0
        %592 = vmatpush1.bf16.msra.mxu0 0
        %593 = vmatprep.subr.bf16.mxu0 0
        %594 = vmatpush1.bf16.msra.mxu0 0
        %595 = vmatprep.subr.bf16.mxu0 0
        %596 = vmatpush1.bf16.msra.mxu0 0
        %597 = vmatprep.subr.bf16.mxu0 0
        %598 = vmatpush1.bf16.msra.mxu0 0
        %599 = vmatprep.subr.bf16.mxu0 0
        %600 = vmatpush1.bf16.msra.mxu0 %v579
        %601 = vmatprep.subr.bf16.mxu0 0
        %602 = vmatpush1.bf16.msra.mxu0 %v578
        %603 = vmatprep.subr.bf16.mxu0 0
        %604 = vmatpush2.bf16.msra.mxu0 0
        %605 = vmatprep.subr.bf16.mxu0 0
        %606 = vmatpush2.bf16.msra.mxu0 0
        %607 = vmatprep.subr.bf16.mxu0 0
        %608 = vmatpush2.bf16.msra.mxu0 0
        %609 = vmatprep.subr.bf16.mxu0 0
        %610 = vmatpush2.bf16.msra.mxu0 0
        %611 = vmatprep.subr.bf16.mxu0 0
        %612 = vmatpush2.bf16.msra.mxu0 0
        %613 = vmatprep.subr.bf16.mxu0 0
        %614 = vmatpush2.bf16.msra.mxu0 0
        %615 = vmatprep.subr.bf16.mxu0 0
        %616 = vmatpush2.bf16.msra.mxu0 0
        %617 = vmatprep.subr.bf16.mxu0 0
        %618 = vmatpush2.bf16.msra.mxu0 0
        %619 = vmatprep.mubr.bf16.mxu0 0
        %620 = vmatmul.mubr.bf16.gmra.mxu0 %v405
        %v621 = vpop.f32.mrf.mxu0
        %v622 = vadd.f32 %v585, %v621
        %v623 = vpop.f32.mrf.mxu0
        %v624 = vpop.f32.mrf.mxu0
        %v625 = vadd.f32 %v585, %v624
        %v626 = vpop.f32.mrf.mxu0
        %627 = vmatprep.mubr.bf16.mxu0 0
        %628 = vmatmul.mubr.bf16.gmra.mxu0 %v408
        %v629 = vpop.f32.mrf.mxu0
        %v630 = vadd.f32 %v585, %v629
        %v631 = vpop.f32.mrf.mxu0
        %v632 = vpop.f32.mrf.mxu0
        %v633 = vadd.f32 %v585, %v632
        %v634 = vpop.f32.mrf.mxu0
        %635 = vdwg.mxu0
        %v636 = vmax.f32 %v622, 0.0
        %v637 = vmax.f32 %v625, 0.0
        %v638 = vmax.f32 %v630, 0.0
        %v639 = vmax.f32 %v633, 0.0
        %v640 = vld [vmem:[%s6] sm:$0xf]
        %v642 = vsel %vm403, %v640, 0
        %644 = vmatprep.subr.mxu0 0.0
        %645 = vmatpush1.msra.mxu0 0.0
        %646 = vmatprep.subr.mxu0 0.0
        %647 = vmatpush1.msra.mxu0 0.0
        %648 = vmatprep.subr.mxu0 0.0
        %649 = vmatpush1.msra.mxu0 0.0
        %650 = vmatprep.subr.mxu0 0.0
        %651 = vmatpush1.msra.mxu0 0.0
        %652 = vmatprep.subr.mxu0 0.0
        %653 = vmatpush1.msra.mxu0 0.0
        %654 = vmatprep.subr.mxu0 0.0
        %655 = vmatpush1.msra.mxu0 0.0
        %656 = vmatprep.subr.mxu0 0.0
        %657 = vmatpush1.msra.mxu0 0.0
        %658 = vmatprep.subr.mxu0 0.0
        %659 = vmatpush1.msra.mxu0 0.0
        %660 = vmatprep.subr.mxu0 0.0
        %661 = vmatpush1.msra.mxu0 0.0
        %662 = vmatprep.subr.mxu0 0.0
        %663 = vmatpush1.msra.mxu0 0.0
        %664 = vmatprep.subr.mxu0 0.0
        %665 = vmatpush1.msra.mxu0 0.0
        %666 = vmatprep.subr.mxu0 0.0
        %667 = vmatpush1.msra.mxu0 0.0
        %668 = vmatprep.subr.mxu0 0.0
        %669 = vmatpush1.msra.mxu0 %v639
        %670 = vmatprep.subr.mxu0 0.0
        %671 = vmatpush1.msra.mxu0 %v638
        %672 = vmatprep.subr.mxu0 0.0
        %673 = vmatpush1.msra.mxu0 %v637
        %674 = vmatprep.subr.mxu0 0.0
        %675 = vmatpush1.msra.mxu0 %v636
        %676 = vmatprep.subr.mxu0 0.0
        %677 = vmatpush2.msra.mxu0 0.0
        %678 = vmatprep.subr.mxu0 0.0
        %679 = vmatpush2.msra.mxu0 0.0
        %680 = vmatprep.subr.mxu0 0.0
        %681 = vmatpush2.msra.mxu0 0.0
        %682 = vmatprep.subr.mxu0 0.0
        %683 = vmatpush2.msra.mxu0 0.0
        %684 = vmatprep.subr.mxu0 0.0
        %685 = vmatpush2.msra.mxu0 0.0
        %686 = vmatprep.subr.mxu0 0.0
        %687 = vmatpush2.msra.mxu0 0.0
        %688 = vmatprep.subr.mxu0 0.0
        %689 = vmatpush2.msra.mxu0 0.0
        %690 = vmatprep.subr.mxu0 0.0
        %691 = vmatpush2.msra.mxu0 0.0
        %692 = vmatprep.subr.mxu0 0.0
        %693 = vmatpush2.msra.mxu0 0.0
        %694 = vmatprep.subr.mxu0 0.0
        %695 = vmatpush2.msra.mxu0 0.0
        %696 = vmatprep.subr.mxu0 0.0
        %697 = vmatpush2.msra.mxu0 0.0
        %698 = vmatprep.subr.mxu0 0.0
        %699 = vmatpush2.msra.mxu0 0.0
        %700 = vmatprep.subr.mxu0 0.0
        %701 = vmatpush2.msra.mxu0 0.0
        %702 = vmatprep.subr.mxu0 0.0
        %703 = vmatpush2.msra.mxu0 0.0
        %704 = vmatprep.subr.mxu0 0.0
        %705 = vmatpush2.msra.mxu0 0.0
        %706 = vmatprep.subr.mxu0 0.0
        %707 = vmatpush2.msra.mxu0 0.0
        %708 = vmatprep.mubr.f32.mxu0 0.0
        %709 = vmatmul.mubr.f32.gmra.mxu0 %v642
        %v710 = vpop.f32.mrf.mxu0
        %v711 = vadd.f32 0.0, %v710
        %v712 = vpop.f32.mrf.mxu0
        %713 = vdwg.mxu0
        %714 = vst [vmem:[%s311] sm:$0xf] %v711
        %s715 = sand.u32 %s189, 1
        %s716 = scalar_lea.sflag [#allocation4], %s715
        %s717 = sand.u32 %s189, 1
        %s718 = smul.addr %s717, 4
        %s719 = scalar_lea.vmem [#allocation5], %s718
        // Predicated region
        $region53: #{tpu_custom_call.1} parent=47 // pred_check
          %p720 = pneg %p199
        $region54: #{tpu_custom_call.1} parent=47 // pred_check_branch
          %722 = sbr.rel (%p720) target = $region56
        $region55: #{tpu_custom_call.1} parent=47 // pred_region
          %s724 = ssub.s32 64, 64
          %725 = vsyncadd %s716, %s724
          %s726 = smul.addr %s24, 64
          %s727 = scalar_lea.hbm %s7, %s726
          %s729 = sshll.u32 %s719, 4
          %s730 = int_to_ptr.vmem [resolvable:$true] %s729
          %732 = dma.vmem_to_hbm [thread:$0]  %s730, 64, %s727, %s716
        $region56: #{tpu_custom_call.1} parent=47 // pred_fallthru
          _
      $region48: #{tpu_custom_call.1} parent=5 // pred_fallthru
        _
      %p733 = scmp.le.s32.totalorder 2, %s19
      // Predicated region
      $region57: #{tpu_custom_call.1} parent=5 // pred_check
        %p734 = pneg %p733
      $region58: #{tpu_custom_call.1} parent=5 // pred_check_branch
        %736 = sbr.rel (%p734) target = $region60
      $region59: #{tpu_custom_call.1} parent=5 // pred_region
        %s737 = ssub.s32 %s19, 2
        // Predicated region
        $region61: #{tpu_custom_call.1} parent=59 // pred_check
          %p738 = pneg %p205
        $region62: #{tpu_custom_call.1} parent=59 // pred_check_branch
          %740 = sbr.rel (%p738) target = $region64
        $region63: #{tpu_custom_call.1} parent=59 // pred_region
          %s741 = sand.u32 %s190, 1
          %s742 = scalar_lea.sflag [#allocation4], %s741
          %s743 = sand.u32 %s190, 1
          %s744 = smul.addr %s743, 4
          %s745 = scalar_lea.vmem [#allocation5], %s744
          %746 = dma.done %s742, 64
        $region64: #{tpu_custom_call.1} parent=59 // pred_fallthru
          _
      $region60: #{tpu_custom_call.1} parent=5 // pred_fallthru
        _
    $region6: #{tpu_custom_call.1} parent=1 // loop_footer
      %s23 = sadd.s32 1, %s19
    $region7: #{tpu_custom_call.1} parent=1 // loop_footer_branch
      %18 = sbr.rel target = $region3
    $region8: #{tpu_custom_call.1} parent=1 // loop_exit
      _
    %747 = vsyncpa [#allocation3], 1
    %s748 = scalar_lea.sflag [#allocation3], 1
    %749 = vsyncpa %s748, 1
    %750 = vsyncpa [#allocation4], 1
    %s751 = scalar_lea.sflag [#allocation4], 1
    %752 = vsyncpa %s751, 1

</llo_original>
